<compile_context>
chip_gen: v7x
topology: tpu7x:2x2x1
jax: 0.10.0
libtpu: 0.0.40
codegen_flags: <defaults>
</compile_context>

<pallas_src>
import functools
import math

import jax
import jax.numpy as jnp
from jax import lax
from jax.experimental import pallas as pl
from jax.experimental.pallas import tpu as pltpu


_INV_SQRT2 = 1.0 / math.sqrt(2.0)
_TANH_C = math.sqrt(2.0 / math.pi)

_F32_BYTES = 4
_VMEM_SOFT_CAP = 40 * 1024 * 1024       # stay well inside v7x's 64 MiB physical VMEM
_VMEM_SCOPED_DEFAULT = 32 * 1024 * 1024  # default scoped limit on v6e/v7x
_VMEM_HARD_CAP = 60 * 1024 * 1024


def _gelu(x, approximate):
    if approximate:
        # tanh form -> EUP slot (otherwise idle here); slight deviation from
        # torch's exact erf GELU, opt-in only.
        return 0.5 * x * (1.0 + jnp.tanh(_TANH_C * (x + 0.044715 * x * x * x)))
    # torch.nn.GELU() default (erf formulation); kept in f32.
    return 0.5 * x * (1.0 + lax.erf(x * _INV_SQRT2))


def _linear_gelu(ot, w_t, b, mxu_dtype, approximate):
    # ot: [n, F] (HBM dtype), w_t: [F, D] (already transposed/cast in wrapper),
    # b: [1, D] f32.  Operand cast happens here (in-kernel) so the Ot DMA stays
    # in its storage dtype; accumulation is always f32.
    x = ot
    if mxu_dtype is not None and x.dtype != mxu_dtype:
        x = x.astype(mxu_dtype)
    acc = jnp.dot(x, w_t, preferred_element_type=jnp.float32)   # [n, D] f32
    return _gelu(acc + b, approximate)


# ------------------ small path: no grid, everything in VMEM ------------------

def _miml_small_kernel(ot_ref, w_ref, b_ref, o_ref, *, agg, mxu_dtype, approximate):
    g = _linear_gelu(ot_ref[...], w_ref[...], b_ref[...], mxu_dtype, approximate)
    if agg == "sum":
        o_ref[...] = jnp.sum(g, axis=0, keepdims=True)          # (1, D)
    elif agg == "mean":
        o_ref[...] = jnp.mean(g, axis=1).reshape(1, -1)          # (1, N) lane-dense
    else:  # max
        o_ref[...] = jnp.max(g, axis=1).reshape(1, -1)           # (1, N) lane-dense


# ------------------ tiled path for large N ------------------

def _miml_rowwise_tiled_kernel(ot_ref, w_ref, b_ref, o_ref, *, agg, mxu_dtype,
                               approximate):
    # Rows are independent -> single "parallel" grid axis (megacore shards it).
    g = _linear_gelu(ot_ref[...], w_ref[...], b_ref[...], mxu_dtype, approximate)
    if agg == "mean":
        r = jnp.mean(g, axis=1)
    else:
        r = jnp.max(g, axis=1)
    o_ref[...] = r.reshape(1, -1)                                # (1, tile_n) lane-dense


def _miml_sum_tiled_kernel(ot_ref, w_ref, b_ref, o_ref, *, n_rows, tile_n,
                           nt_half, needs_mask, mxu_dtype, approximate):
    # grid = (2, nt_half): leading axis "parallel" (per-core partial sums, wins
    # on v7x's 2 TCs), trailing axis "arbitrary" with a resident accumulator.
    c = pl.program_id(0)
    i = pl.program_id(1)
    block_idx = c * nt_half + i

    @pl.when(i == 0)
    def _():
        o_ref[...] = jnp.zeros_like(o_ref)

    g = _linear_gelu(ot_ref[...], w_ref[...], b_ref[...], mxu_dtype, approximate)

    if needs_mask:
        # Mask is only paid on tiles that actually reach past N (pl.when), and
        # the whole branch is compiled out when the tiling divides N exactly.
        is_edge = (block_idx + 1) * tile_n > n_rows

        @pl.when(is_edge)
        def _():
            row = block_idx * tile_n + lax.broadcasted_iota(jnp.int32, g.shape, 0)
            gm = jnp.where(row < n_rows, g, 0.0)                 # select: NaN-safe
            o_ref[...] += jnp.sum(gm, axis=0).reshape(1, 1, -1)

        @pl.when(jnp.logical_not(is_edge))
        def _():
            o_ref[...] += jnp.sum(g, axis=0).reshape(1, 1, -1)
    else:
        o_ref[...] += jnp.sum(g, axis=0).reshape(1, 1, -1)


# ------------------ VMEM budgeting ------------------

def _tile_vmem_bytes(tile_n, F, D, in_bytes, w_bytes, ot_bufs):
    ot = ot_bufs * tile_n * F * in_bytes       # streaming Ot tiles
    w = 2 * F * D * w_bytes                    # weight (double-buffered even if constant)
    b = 2 * D * _F32_BYTES                     # bias
    out = 2 * max(tile_n, D) * _F32_BYTES      # output block
    work = 2 * tile_n * D * _F32_BYTES         # f32 matmul result + gelu temp
    return ot + w + b + out + work


# ------------------ wrapper ------------------

def miml_forward(Ot, weight, bias, agg, *, mxu_dtype=None, tile_n=512,
                 approximate_gelu=False, ot_buffers=None):
    """MIML forward.

    Ot:     [N, F]  (instances x features)
    weight: [D, F]  (PyTorch nn.Linear layout)
    bias:   [D]
    agg:    'sum' | 'mean' | 'max' | anything else (passthrough, no kernel)
    mxu_dtype: optionally cast MXU operands (e.g. jnp.bfloat16 -- a win on all
               generations incl. v5e, whose MXU is bf16-native); the cast of Ot
               happens inside the kernel, accumulation/GELU/reductions stay f32.
    tile_n: row tile for the large-N path (multiple of 128); auto-shrunk if the
            double-buffered footprint would not fit a v7x-safe VMEM budget.
    approximate_gelu: use the tanh GELU approximation (EUP) instead of exact erf.
    ot_buffers: optional pipeline depth for the Ot stream (pl.Buffered(k)).
    """
    if agg not in ("sum", "mean", "max"):
        # Module returns the unmodified input in this branch; no kernel.
        return Ot

    N, F = Ot.shape
    D = weight.shape[0]

    # One-time wrapper-side transpose (+ optional cast) of the resident weight:
    # the kernel then uses a plain [n,F]x[F,D] contraction -> no per-step XLU
    # transpose of the weight tile.
    w_t = weight.T
    if mxu_dtype is not None:
        w_t = w_t.astype(mxu_dtype)
    b2 = bias.astype(jnp.float32).reshape(1, D)

    in_bytes = jnp.dtype(Ot.dtype).itemsize
    w_bytes = jnp.dtype(w_t.dtype).itemsize
    bufs = 2 if ot_buffers is None else int(ot_buffers)

    tn = max(128, (int(tile_n) // 128) * 128)
    while tn > 128 and _tile_vmem_bytes(tn, F, D, in_bytes, w_bytes, bufs) > _VMEM_SOFT_CAP:
        tn = max(128, ((tn // 2) // 128) * 128)
    # TODO(synk): if 2*F*D alone exceeds the VMEM budget (huge weight), add a D
    # (and/or F) grid axis so the weight streams instead of staying resident.

    est = _tile_vmem_bytes(tn, F, D, in_bytes, w_bytes, bufs)
    vmem_limit = None
    if est > (3 * _VMEM_SCOPED_DEFAULT) // 4:
        vmem_limit = int(min(max(est * 3 // 2, _VMEM_SCOPED_DEFAULT), _VMEM_HARD_CAP))

    if N <= tn:
        # Single invocation, no grid, no pipeline machinery.
        out_shape = (1, D) if agg == "sum" else (1, N)
        result = pl.pallas_call(
            functools.partial(_miml_small_kernel, agg=agg, mxu_dtype=mxu_dtype,
                              approximate=approximate_gelu),
            out_shape=jax.ShapeDtypeStruct(out_shape, jnp.float32),
            in_specs=[pl.BlockSpec(memory_space=pltpu.MemorySpace.VMEM)] * 3,
            out_specs=pl.BlockSpec(memory_space=pltpu.MemorySpace.VMEM),
        )(Ot, w_t, b2)
        return result[0]

    # Large N: stream Ot tiles; weight/bias stay resident in VMEM.
    nt = pl.cdiv(N, tn)

    def ot_spec(index_map):
        if ot_buffers is not None:
            return pl.BlockSpec((tn, F), index_map,
                                pipeline_mode=pl.Buffered(int(ot_buffers)))
        return pl.BlockSpec((tn, F), index_map)

    if agg == "sum":
        nt_half = pl.cdiv(nt, 2)
        needs_mask = (2 * nt_half * tn) != N
        if 2 * nt_half == nt:
            ot_map = lambda c, i: (c * nt_half + i, 0)
        else:
            # Odd tile count: the last block of core-group 1 is a phantom;
            # clamp its DMA in-bounds, the kernel masks its contribution to 0.
            ot_map = lambda c, i: (jnp.minimum(c * nt_half + i, nt - 1), 0)

        result = pl.pallas_call(
            functools.partial(_miml_sum_tiled_kernel, n_rows=N, tile_n=tn,
                              nt_half=nt_half, needs_mask=needs_mask,
                              mxu_dtype=mxu_dtype, approximate=approximate_gelu),
            out_shape=jax.ShapeDtypeStruct((2, 1, D), jnp.float32),
            grid=(2, nt_half),
            in_specs=[
                ot_spec(ot_map),
                pl.BlockSpec((F, D), lambda c, i: (0, 0)),    # weight resident
                pl.BlockSpec((1, D), lambda c, i: (0, 0)),    # bias resident
            ],
            out_specs=pl.BlockSpec((1, 1, D), lambda c, i: (c, 0, 0)),
            compiler_params=pltpu.CompilerParams(
                dimension_semantics=("parallel", "arbitrary"),
                vmem_limit_bytes=vmem_limit),
        )(Ot, w_t, b2)
        return jnp.sum(result, axis=(0, 1))                    # add per-core partials

    # mean / max : rows independent, single "parallel" axis, lane-dense output.
    result = pl.pallas_call(
        functools.partial(_miml_rowwise_tiled_kernel, agg=agg,
                          mxu_dtype=mxu_dtype, approximate=approximate_gelu),
        out_shape=jax.ShapeDtypeStruct((1, N), jnp.float32),
        grid=(nt,),
        in_specs=[
            ot_spec(lambda i: (i, 0)),
            pl.BlockSpec((F, D), lambda i: (0, 0)),            # weight resident
            pl.BlockSpec((1, D), lambda i: (0, 0)),            # bias resident
        ],
        out_specs=pl.BlockSpec((1, tn), lambda i: (0, i)),
        compiler_params=pltpu.CompilerParams(
            dimension_semantics=("parallel",),
            vmem_limit_bytes=vmem_limit),
    )(Ot, w_t, b2)
    return result[0]


# ------------------ reference & init ------------------

def _reference(Ot, weight, bias, agg):
    out = Ot @ weight.T + bias
    g = 0.5 * out * (1.0 + lax.erf(out * _INV_SQRT2))
    if agg == "sum":
        return jnp.sum(g, axis=0)
    if agg == "mean":
        return jnp.mean(g, axis=1)
    if agg == "max":
        return jnp.max(g, axis=1)
    return Ot


def _init_params(key, num_features_concat, num_drugs):
    kw, kb = jax.random.split(key)
    fan_in, fan_out = num_features_concat, num_drugs
    gain = math.sqrt(2.0)  # xavier_uniform_ with gain=sqrt(2)
    bound_w = gain * math.sqrt(6.0 / (fan_in + fan_out))
    weight = jax.random.uniform(
        kw, (num_drugs, num_features_concat), jnp.float32, -bound_w, bound_w)
    bound_b = 1.0 / math.sqrt(fan_in)  # nn.Linear default bias init
    bias = jax.random.uniform(kb, (num_drugs,), jnp.float32, -bound_b, bound_b)
    return weight, bias


def _check(name, got, want, atol, rtol):
    if got.shape != want.shape or not jnp.allclose(got, want, atol=atol, rtol=rtol):
        diff = float(jnp.max(jnp.abs(got - want))) if got.shape == want.shape else -1.0
        print(f"MISMATCH {name} (max abs diff {diff})")
        return False
    return True


if __name__ == "__main__":
    key = jax.random.PRNGKey(0)
    k_in, k_par, k_in2, k_par2, k_in3 = jax.random.split(key, 5)
    ok = True

    # ---- small shapes (typical MIML "bag"): no-grid path ----
    N, F, D = 8, 32, 16
    Ot = jax.random.normal(k_in, (N, F), jnp.float32)
    weight, bias = _init_params(k_par, F, D)

    for agg in ("sum", "mean", "max"):
        got = jax.block_until_ready(miml_forward(Ot, weight, bias, agg))
        ok &= _check(f"small f32 {agg}", got, _reference(Ot, weight, bias, agg),
                     1e-5, 1e-5)

    # bf16 MXU operands (in-kernel cast), f32 accumulation / GELU.
    for agg in ("sum", "mean", "max"):
        got = jax.block_until_ready(
            miml_forward(Ot, weight, bias, agg, mxu_dtype=jnp.bfloat16))
        ok &= _check(f"small bf16 {agg}", got, _reference(Ot, weight, bias, agg),
                     1e-1, 1e-1)

    # tanh-approximate GELU (opt-in).
    for agg in ("sum", "mean", "max"):
        got = jax.block_until_ready(
            miml_forward(Ot, weight, bias, agg, approximate_gelu=True))
        ok &= _check(f"small tanh-gelu {agg}", got, _reference(Ot, weight, bias, agg),
                     5e-2, 5e-2)

    # Passthrough branch (unknown agg -> input returned unchanged, no kernel).
    passthrough = miml_forward(Ot, weight, bias, "none")
    if not bool(jnp.array_equal(passthrough, Ot)):
        ok = False
        print("MISMATCH passthrough")

    # ---- tiled path: even tile count, partial last tile (N=640, tile_n=512) ----
    N2, F2, D2 = 640, 256, 128
    Ot2 = jax.random.normal(k_in2, (N2, F2), jnp.float32)
    weight2, bias2 = _init_params(k_par2, F2, D2)
    for agg in ("sum", "mean", "max"):
        got = jax.block_until_ready(
            miml_forward(Ot2, weight2, bias2, agg, tile_n=512))
        ok &= _check(f"tiled f32 N={N2} {agg}", got,
                     _reference(Ot2, weight2, bias2, agg), 1e-2, 1e-2)

    # ---- tiled path: odd tile count (exercises the clamped phantom block) ----
    N3 = 1408
    Ot3 = jax.random.normal(k_in3, (N3, F2), jnp.float32)
    for agg in ("sum", "mean", "max"):
        got = jax.block_until_ready(
            miml_forward(Ot3, weight2, bias2, agg, tile_n=512))
        ok &= _check(f"tiled f32 N={N3} {agg}", got,
                     _reference(Ot3, weight2, bias2, agg), 1e-2, 1e-2)

    # ---- tiled path with bf16 MXU operands (in-kernel cast on the stream) ----
    for agg in ("mean", "max"):
        got = jax.block_until_ready(
            miml_forward(Ot2, weight2, bias2, agg, tile_n=512, mxu_dtype=jnp.bfloat16))
        ok &= _check(f"tiled bf16 {agg}", got,
                     _reference(Ot2, weight2, bias2, agg), 1e-1, 1e-1)

    if ok:
        print("KERNEL_OK")
</pallas_src>

<mosaic_0001>
module attributes {stable_mosaic.version = 11 : i64} {
  func.func @_miml_small_kernel(%arg0: memref<8x32xf32, #tpu.memory_space<vmem>>, %arg1: memref<32x16xf32, #tpu.memory_space<vmem>>, %arg2: memref<1x16xf32, #tpu.memory_space<vmem>>, %arg3: memref<1x16xf32, #tpu.memory_space<vmem>>) attributes {dimension_semantics = [], scalar_prefetch = 0 : i64, scratch_operands = 0 : i64, tpu.core_type = #tpu.core_type<tc>} {
    %c0 = arith.constant 0 : index
    %c0_0 = arith.constant 0 : index
    %0 = vector.load %arg0[%c0, %c0_0] : memref<8x32xf32, #tpu.memory_space<vmem>>, vector<8x32xf32>
    %c0_1 = arith.constant 0 : index
    %c0_2 = arith.constant 0 : index
    %1 = vector.load %arg1[%c0_1, %c0_2] : memref<32x16xf32, #tpu.memory_space<vmem>>, vector<32x16xf32>
    %c0_3 = arith.constant 0 : index
    %c0_4 = arith.constant 0 : index
    %2 = vector.load %arg2[%c0_3, %c0_4] : memref<1x16xf32, #tpu.memory_space<vmem>>, vector<1x16xf32>
    %cst = arith.constant dense<0.000000e+00> : vector<8x16xf32>
    %3 = tpu.matmul %0, %1, %cst {dimension_numbers = #tpu.dot_dimension_numbers<[1], [0], [0], [1], [0, 0, 1, 1], [], []>} : vector<8x32xf32>, vector<32x16xf32>, vector<8x16xf32> -> vector<8x16xf32>
    %4 = vector.broadcast %2 : vector<1x16xf32> to vector<8x16xf32>
    %5 = arith.addf %3, %4 : vector<8x16xf32>
    %cst_5 = arith.constant 5.000000e-01 : f32
    %6 = vector.broadcast %cst_5 : f32 to vector<8x16xf32>
    %7 = arith.mulf %6, %5 : vector<8x16xf32>
    %cst_6 = arith.constant 0.707106769 : f32
    %8 = vector.broadcast %cst_6 : f32 to vector<8x16xf32>
    %9 = arith.mulf %5, %8 : vector<8x16xf32>
    %10 = math.erf %9 : vector<8x16xf32>
    %cst_7 = arith.constant 1.000000e+00 : f32
    %11 = vector.broadcast %cst_7 : f32 to vector<8x16xf32>
    %12 = arith.addf %11, %10 : vector<8x16xf32>
    %13 = arith.mulf %7, %12 : vector<8x16xf32>
    %cst_8 = arith.constant dense<0.000000e+00> : vector<16xf32>
    %14 = vector.multi_reduction <add>, %13, %cst_8 [0] : vector<8x16xf32> to vector<16xf32>
    %15 = vector.shape_cast %14 : vector<16xf32> to vector<1x16xf32>
    %c0_9 = arith.constant 0 : index
    %c0_10 = arith.constant 0 : index
    %16 = vector.load %arg3[%c0_9, %c0_10] : memref<1x16xf32, #tpu.memory_space<vmem>>, vector<1x16xf32>
    tpu.vector_store %arg3[%c0_9, %c0_10], %15 {strides = array<i32>} : memref<1x16xf32, #tpu.memory_space<vmem>>, vector<1x16xf32>,
    return
  }
}

</mosaic_0001>

<llo_original>
// kernel: tpu_custom_call.1
$region0: #{tpu_custom_call.1}
  #allocation0 [shape = 'u32[]', space=smem, size = 0x4, offset = 0x4, fixed_abs, tag = 'smem constant byte address 0x4 - core index']
  #allocation1 [shape = 'u32[144,128]{1,0:T(1,128)}', space=vmem, size = 0x12000, scoped, tag = 'internal scratch']
  %s0 = inlined_call_operand.vmem [shape: f32[8,32], index: 0, kind: input, shape index: {}]
  %s1 = inlined_call_operand.vmem [shape: f32[32,16], index: 1, kind: input, shape index: {}]
  %s2 = inlined_call_operand.vmem [shape: f32[1,16], index: 2, kind: input, shape index: {}]
  %s3 = inlined_call_operand.hbm [shape: f32[1,16], index: 3, kind: output, shape index: {}]
  %s4 = sld [smem:[#allocation0]]
  $region22: #{tpu_custom_call.1} parent=0
    _
  %s6 = ssub.s32 1, %s4
  %s7 = scalar_select 0, %s6, %s4
  $region1: #{tpu_custom_call.1} parent=0
    #allocation2 [shape = 'u8[512]{0}', space=vmem, size = 0x400, scoped, tag = 'output window, operand 0, single buffered']
    #allocation3 [shape = 's32[1]{0}', space=sflag, size = 0x4, scoped, tag = 'scoped memory for tpu_custom_call.1']
    %8 = vsyncpa [#allocation3], 0
    // Predicated region
    $region2: #{tpu_custom_call.1} parent=1 // pred_check
      _
    $region3: #{tpu_custom_call.1} parent=1 // pred_check_branch
      %10 = sbr.rel (0) target = $region5
    $region4: #{tpu_custom_call.1} parent=1 // pred_region
      _
    $region5: #{tpu_custom_call.1} parent=1 // pred_fallthru
      _
    // Predicated region
    $region6: #{tpu_custom_call.1} parent=1 // pred_check
      _
    $region7: #{tpu_custom_call.1} parent=1 // pred_check_branch
      %12 = sbr.rel (0) target = $region9
    $region8: #{tpu_custom_call.1} parent=1 // pred_region
      _
    $region9: #{tpu_custom_call.1} parent=1 // pred_fallthru
      _
    // Predicated region
    $region10: #{tpu_custom_call.1} parent=1 // pred_check
      _
    $region11: #{tpu_custom_call.1} parent=1 // pred_check_branch
      %14 = sbr.rel (0) target = $region13
    $region12: #{tpu_custom_call.1} parent=1 // pred_region
      _
    $region13: #{tpu_custom_call.1} parent=1 // pred_fallthru
      _
    %v15 = vld [vmem:[%s0] sm:$0xff]
    %v16 = vld [vmem:[%s1] sm:$0xff]
    %v17 = vld [vmem:[%s1 + $0x8] sm:$0xff]
    %v18 = vld [vmem:[%s1 + $0x10] sm:$0xff]
    %v19 = vld [vmem:[%s1 + $0x18] sm:$0xff]
    %v20 = vld [vmem:[%s2] sm:$0x1]
    %v22 = vlaneseq
    %v23 = vshrl.u32 %v22, 7
    %v24 = vsub.s32 0, %v23
    %v25 = vrot.slane %v20, %v24
    %vm27 = vcmask 261120
    %v29 = vsel %vm27, %v15, 0
    %31 = vmatprep.subr.mxu0 0.0
    %32 = vmatpush1.msra.mxu0 %v16
    %33 = vmatprep.subr.mxu0 0.0
    %34 = vmatpush1.msra.mxu0 %v17
    %35 = vmatprep.subr.mxu0 0.0
    %36 = vmatpush1.msra.mxu0 %v18
    %37 = vmatprep.subr.mxu0 0.0
    %38 = vmatpush1.msra.mxu0 %v19
    %39 = vmatprep.subr.mxu0 0.0
    %40 = vmatpush1.msra.mxu0 0.0
    %41 = vmatprep.subr.mxu0 0.0
    %42 = vmatpush1.msra.mxu0 0.0
    %43 = vmatprep.subr.mxu0 0.0
    %44 = vmatpush1.msra.mxu0 0.0
    %45 = vmatprep.subr.mxu0 0.0
    %46 = vmatpush1.msra.mxu0 0.0
    %47 = vmatprep.subr.mxu0 0.0
    %48 = vmatpush1.msra.mxu0 0.0
    %49 = vmatprep.subr.mxu0 0.0
    %50 = vmatpush1.msra.mxu0 0.0
    %51 = vmatprep.subr.mxu0 0.0
    %52 = vmatpush1.msra.mxu0 0.0
    %53 = vmatprep.subr.mxu0 0.0
    %54 = vmatpush1.msra.mxu0 0.0
    %55 = vmatprep.subr.mxu0 0.0
    %56 = vmatpush1.msra.mxu0 0.0
    %57 = vmatprep.subr.mxu0 0.0
    %58 = vmatpush1.msra.mxu0 0.0
    %59 = vmatprep.subr.mxu0 0.0
    %60 = vmatpush1.msra.mxu0 0.0
    %61 = vmatprep.subr.mxu0 0.0
    %62 = vmatpush1.msra.mxu0 0.0
    %63 = vmatprep.subr.mxu0 0.0
    %64 = vmatpush1.msra.mxu0 0.0
    %65 = vmatprep.subr.mxu0 0.0
    %66 = vmatpush1.msra.mxu0 0.0
    %67 = vmatprep.subr.mxu0 0.0
    %68 = vmatpush1.msra.mxu0 0.0
    %69 = vmatprep.subr.mxu0 0.0
    %70 = vmatpush1.msra.mxu0 0.0
    %71 = vmatprep.subr.mxu0 0.0
    %72 = vmatpush1.msra.mxu0 0.0
    %73 = vmatprep.subr.mxu0 0.0
    %74 = vmatpush1.msra.mxu0 0.0
    %75 = vmatprep.subr.mxu0 0.0
    %76 = vmatpush1.msra.mxu0 0.0
    %77 = vmatprep.subr.mxu0 0.0
    %78 = vmatpush1.msra.mxu0 0.0
    %79 = vmatprep.subr.mxu0 0.0
    %80 = vmatpush1.msra.mxu0 0.0
    %81 = vmatprep.subr.mxu0 0.0
    %82 = vmatpush1.msra.mxu0 0.0
    %83 = vmatprep.subr.mxu0 0.0
    %84 = vmatpush1.msra.mxu0 0.0
    %85 = vmatprep.subr.mxu0 0.0
    %86 = vmatpush1.msra.mxu0 0.0
    %87 = vmatprep.subr.mxu0 0.0
    %88 = vmatpush1.msra.mxu0 0.0
    %89 = vmatprep.subr.mxu0 0.0
    %90 = vmatpush1.msra.mxu0 0.0
    %91 = vmatprep.subr.mxu0 0.0
    %92 = vmatpush1.msra.mxu0 0.0
    %93 = vmatprep.subr.mxu0 0.0
    %94 = vmatpush1.msra.mxu0 0.0
    %95 = vmatprep.mubr.f32.mxu0 0.0
    %96 = vmatmul.mubr.f32.gmra.mrb[0].mxu0 %v29
    %v97 = vpop.f32.mrb[0].mxu0
    %v98 = vadd.f32 %v25, %v97
    %v99 = vpop.f32.mrb[0].mxu0
    %100 = vdwg.mxu0
    %v101 = vmul.f32 %v98, 0.5
    %v102 = vmul.f32 %v98, 0.70710677
    %v103 = verf.f32.pop %v102
    %v104 = vadd.f32 %v103, 1.0
    %v105 = vmul.f32 %v101, %v104
    %vm106 = vcmask 130048
    %v107 = vsel %vm106, %v105, 0.0
    %v108 = vrot.slane %v107, 4
    %v109 = vadd.f32 %v107, %v108
    %v110 = vrot.slane %v109, 2
    %v111 = vadd.f32 %v109, %v110
    %v112 = vrot.slane %v111, 1
    %v113 = vadd.f32 %v111, %v112
    %vm114 = vcmask 122880
    %115 = vst.msk [vmem:[#allocation2] sm:$0x1] %vm114, %v113
    // Predicated region
    $region14: #{tpu_custom_call.1} parent=1 // pred_check
      _
    $region15: #{tpu_custom_call.1} parent=1 // pred_check_branch
      %117 = sbr.rel (0) target = $region17
    $region16: #{tpu_custom_call.1} parent=1 // pred_region
      %s119 = ssub.s32 16, 16
      %120 = vsyncadd [#allocation3], %s119
      %s122 = sshll.u32 [#allocation2], 4
      %s123 = int_to_ptr.vmem [resolvable:$true] %s122
      %125 = dma.vmem_to_hbm [thread:$0]  %s123, 16, %s3, [#allocation3]
    $region17: #{tpu_custom_call.1} parent=1 // pred_fallthru
      _
    // Predicated region
    $region18: #{tpu_custom_call.1} parent=1 // pred_check
      _
    $region19: #{tpu_custom_call.1} parent=1 // pred_check_branch
      %127 = sbr.rel (0) target = $region21
    $region20: #{tpu_custom_call.1} parent=1 // pred_region
      %128 = dma.done [#allocation3], 16
    $region21: #{tpu_custom_call.1} parent=1 // pred_fallthru
      _
    %129 = vsyncpa [#allocation3], 1

</llo_original>
